<compile_context>
chip_gen: v7x
topology: tpu7x:2x2x1
jax: 0.10.0
libtpu: 0.0.40
codegen_flags: <defaults>
</compile_context>

<pallas_src>
import jax
import jax.numpy as jnp
from jax.experimental import pallas as pl
from jax.experimental.pallas import tpu as pltpu


_NEG_LARGE = -1.0e30  # finite "minus infinity" (avoids inf-inf NaNs)


# ----------------------------------------------------------------------------
# Kernels
# ----------------------------------------------------------------------------
def _slab_kernel(x_ref, w_ref, b_ref, o_ref, slab_ref, m_ref, s_ref):
    """Slab path.

    Grid = (row tiles, phase, vocab tiles).
      phase 0: matmul sweep + online (m, s) stats + spill logits into slab.
      phase 1: broadcast-subtract lse from the VMEM slab (no matmul, no weight
               DMA -- the weight block index is frozen during phase 1).
    """
    phase = pl.program_id(1)
    j = pl.program_id(2)
    nv = pl.num_programs(2)
    tv = o_ref.shape[-1]
    col = pl.multiple_of(j * tv, 128)

    @pl.when(phase == 0)
    def _sweep():
        @pl.when(j == 0)
        def _init():
            m_ref[...] = jnp.full_like(m_ref, _NEG_LARGE)
            s_ref[...] = jnp.zeros_like(s_ref)

        logits = jnp.dot(x_ref[...], w_ref[...],
                         preferred_element_type=jnp.float32)
        logits = logits + b_ref[...].astype(jnp.float32)
        slab_ref[:, pl.ds(col, tv)] = logits

        m_old = m_ref[...]
        m_new = jnp.maximum(m_old, jnp.max(logits, axis=-1, keepdims=True))
        s_ref[...] = (s_ref[...] * jnp.exp(m_old - m_new)
                      + jnp.sum(jnp.exp(logits - m_new), axis=-1, keepdims=True))
        m_ref[...] = m_new

        @pl.when(j == nv - 1)
        def _finalize():
            # Compute lse once per row tile; reuse m_ref to hold it.
            m_ref[...] = m_ref[...] + jnp.log(s_ref[...])

    @pl.when(phase == 1)
    def _write():
        # Invariant the out_spec relies on: output block (i, 0) is parked
        # (never flushed) for the whole of phase 0 and is fully rewritten here
        # at j == 0 before its first flush.
        o_ref[...] = (slab_ref[:, pl.ds(col, tv)] - m_ref[...]).astype(o_ref.dtype)


def _logits_lse_kernel(x_ref, w_ref, b_ref, logit_ref, lse_ref, m_ref, s_ref):
    """Fixup path, pass 1: raw logits + per-row lse in a single weight sweep."""
    j = pl.program_id(1)
    nv = pl.num_programs(1)

    @pl.when(j == 0)
    def _init():
        m_ref[...] = jnp.full_like(m_ref, _NEG_LARGE)
        s_ref[...] = jnp.zeros_like(s_ref)

    logits = jnp.dot(x_ref[...], w_ref[...], preferred_element_type=jnp.float32)
    logits = logits + b_ref[...].astype(jnp.float32)
    logit_ref[...] = logits.astype(logit_ref.dtype)

    m_old = m_ref[...]
    m_new = jnp.maximum(m_old, jnp.max(logits, axis=-1, keepdims=True))
    s_ref[...] = (s_ref[...] * jnp.exp(m_old - m_new)
                  + jnp.sum(jnp.exp(logits - m_new), axis=-1, keepdims=True))
    m_ref[...] = m_new

    @pl.when(j == nv - 1)
    def _finalize():
        lse_ref[...] = m_ref[...] + jnp.log(s_ref[...])


def _fixup_kernel(logit_ref, lse_ref, o_ref):
    """Fixup path, pass 2: in-place (aliased) log-softmax normalization."""
    o_ref[...] = (logit_ref[...].astype(jnp.float32) - lse_ref[...]).astype(o_ref.dtype)


# ----------------------------------------------------------------------------
# Tile-size / VMEM-budget helpers
# ----------------------------------------------------------------------------
def _round_up(x, m):
    return ((x + m - 1) // m) * m


def _vmem_limit_bytes():
    cap = 128 * 1024 * 1024
    try:
        info = pltpu.get_tpu_info()
        cap = int(getattr(info, "vmem_capacity_bytes", cap) or cap)
    except Exception:
        pass
    # Leave headroom for Mosaic-internal scratch (f32 logits temps, DMA state).
    # 128 MiB chips (v5e/v6e) -> 112 MiB, 64 MiB (v7x) -> 48 MiB.
    return max(32 * 1024 * 1024, cap - 16 * 1024 * 1024)


def _chip_default_tm():
    # Row tile near each generation's MXU/HBM crossover (v5e~240, v6e~680, v7x~310).
    kind = ""
    try:
        kind = jax.devices()[0].device_kind.lower()
    except Exception:
        pass
    if "v7" in kind:
        return 384
    if "v6" in kind:
        return 512
    if "v5" in kind:
        return 256
    return 256


def _tile_bytes(tm, tv, D, in_bytes, w_bytes, out_bytes, slab_cols):
    total = 2 * tm * D * in_bytes      # x block (double-buffered)
    total += 2 * D * tv * w_bytes      # W^T block
    total += 2 * tv * 4                # bias block
    total += 2 * tm * tv * out_bytes   # output block
    total += 2 * tm * tv * 4           # implicit f32 logits temporaries
    total += 4 * tm * 4                # m / s scratch
    total += tm * slab_cols * 4        # resident logits slab (slab path only)
    return total


def _pick_vocab_tile(vp, tv_max, fits):
    """Largest multiple of 128 that divides vp, <= tv_max and fits the budget."""
    cand = min(tv_max, vp)
    cand -= cand % 128
    while cand > 128:
        if vp % cand == 0 and fits(cand):
            return cand
        cand -= 128
    return 128


# ----------------------------------------------------------------------------
# Forward wrapper
# ----------------------------------------------------------------------------
def generator_forward(x, w_t, b, *, tm=None, tv_max=2048, out_dtype=None,
                      force_path=None):
    """log_softmax(x @ w_t + b, axis=-1).

    x:   (..., D)   activations
    w_t: (D, V)     PyTorch nn.Linear weight, pre-transposed
    b:   (V,)       bias
    force_path: None | "slab" | "fixup" (testing / large-vocab override)
    """
    *lead, D = x.shape
    Dw, V = w_t.shape
    assert Dw == D and b.shape == (V,)
    out_dtype = x.dtype if out_dtype is None else out_dtype

    in_bytes = jnp.dtype(x.dtype).itemsize
    w_bytes = jnp.dtype(w_t.dtype).itemsize
    out_bytes = jnp.dtype(out_dtype).itemsize

    M = 1
    for d in lead:
        M *= d
    vmem_limit = _vmem_limit_bytes()

    # ---- row tile ----------------------------------------------------------
    tm = _chip_default_tm() if tm is None else tm
    tm = max(8, min(tm, _round_up(M, 8)))
    tm -= tm % 8
    # Shrink tm if even a 128-wide vocab tile cannot fit (very large D).
    while tm > 128 and _tile_bytes(tm, 128, D, in_bytes, w_bytes, out_bytes, 0) > vmem_limit:
        tm = max(128, (tm // 2 // 8) * 8)

    Mp = _round_up(M, tm)
    Vp = _round_up(V, 128)

    # ---- path choice + vocab tile -------------------------------------------
    slab_ok = _tile_bytes(tm, 128, D, in_bytes, w_bytes, out_bytes, Vp) <= vmem_limit
    if force_path == "slab":
        use_slab = True
    elif force_path == "fixup":
        use_slab = False
    else:
        use_slab = slab_ok

    slab_cols = Vp if use_slab else 0
    tv = _pick_vocab_tile(
        Vp, tv_max,
        lambda t: _tile_bytes(tm, t, D, in_bytes, w_bytes, out_bytes, slab_cols)
        <= vmem_limit)
    nv = Vp // tv

    # ---- pad / reshape inputs ------------------------------------------------
    x2 = x.reshape(M, D)
    if Mp != M:
        x2 = jnp.pad(x2, ((0, Mp - M), (0, 0)))
    b_f32 = b.astype(jnp.float32)
    if Vp != V:
        w_t = jnp.pad(w_t, ((0, 0), (0, Vp - V)))
        # Padded vocab columns get a huge negative bias -> exp(.) == 0 in the
        # normalizer, so real columns are unaffected.
        b_f32 = jnp.pad(b_f32, (0, Vp - V), constant_values=_NEG_LARGE)
    b2 = b_f32.reshape(1, Vp)

    if use_slab:
        grid = (Mp // tm, 2, nv)
        cost = pl.CostEstimate(
            flops=2 * Mp * D * Vp,                       # single matmul sweep
            transcendentals=Mp * Vp + Mp,                # exp per logit + log per row
            bytes_accessed=(Mp * D * in_bytes
                            + (Mp // tm) * D * Vp * w_bytes
                            + Mp * Vp * out_bytes),
        )
        out = pl.pallas_call(
            _slab_kernel,
            out_shape=jax.ShapeDtypeStruct((Mp, Vp), out_dtype),
            grid_spec=pltpu.PrefetchScalarGridSpec(
                num_scalar_prefetch=0,
                grid=grid,
                in_specs=[
                    # x row tile: constant over (phase, j) -> fetched once per row tile.
                    pl.BlockSpec((tm, D), lambda i, p, j: (i, 0)),
                    # W^T / bias vocab slices: frozen at the last phase-0 block
                    # during phase 1 -> no weight DMA on the write sweep.
                    pl.BlockSpec((D, tv),
                                 lambda i, p, j: (0, j * (1 - p) + (nv - 1) * p)),
                    pl.BlockSpec((1, tv),
                                 lambda i, p, j: (0, j * (1 - p) + (nv - 1) * p)),
                ],
                # Output parks on block (i, 0) during phase 0 (never flushed
                # with junk: fully rewritten at phase 1, j == 0 before its
                # first flush); phase 1 walks (i, j) lane-dense tiles.
                out_specs=pl.BlockSpec((tm, tv), lambda i, p, j: (i, j * p)),
                scratch_shapes=[
                    pltpu.VMEM((tm, Vp), jnp.float32),   # resident logits slab
                    pltpu.VMEM((tm, 1), jnp.float32),    # running max -> lse
                    pltpu.VMEM((tm, 1), jnp.float32),    # running sum(exp)
                ],
            ),
            compiler_params=pltpu.CompilerParams(
                dimension_semantics=("parallel", "arbitrary", "arbitrary"),
                vmem_limit_bytes=vmem_limit,
            ),
            cost_estimate=cost,
        )(x2, w_t, b2)
    else:
        # Write-then-fixup path for vocabs whose logits slab does not fit VMEM.
        grid = (Mp // tm, nv)
        cost = pl.CostEstimate(
            flops=2 * Mp * D * Vp,
            transcendentals=Mp * Vp + Mp,
            bytes_accessed=(Mp * D * in_bytes
                            + (Mp // tm) * D * Vp * w_bytes
                            + Mp * Vp * out_bytes + Mp * 4),
        )
        logits, lse = pl.pallas_call(
            _logits_lse_kernel,
            out_shape=(jax.ShapeDtypeStruct((Mp, Vp), out_dtype),
                       jax.ShapeDtypeStruct((Mp, 1), jnp.float32)),
            grid_spec=pltpu.PrefetchScalarGridSpec(
                num_scalar_prefetch=0,
                grid=grid,
                in_specs=[
                    pl.BlockSpec((tm, D), lambda i, j: (i, 0)),
                    pl.BlockSpec((D, tv), lambda i, j: (0, j)),
                    pl.BlockSpec((1, tv), lambda i, j: (0, j)),
                ],
                out_specs=[
                    pl.BlockSpec((tm, tv), lambda i, j: (i, j)),
                    pl.BlockSpec((tm, 1), lambda i, j: (i, 0)),
                ],
                scratch_shapes=[
                    pltpu.VMEM((tm, 1), jnp.float32),    # running max
                    pltpu.VMEM((tm, 1), jnp.float32),    # running sum(exp)
                ],
            ),
            compiler_params=pltpu.CompilerParams(
                dimension_semantics=("parallel", "arbitrary"),
                vmem_limit_bytes=vmem_limit,
            ),
            cost_estimate=cost,
        )(x2, w_t, b2)

        out = pl.pallas_call(
            _fixup_kernel,
            out_shape=jax.ShapeDtypeStruct((Mp, Vp), out_dtype),
            grid_spec=pltpu.PrefetchScalarGridSpec(
                num_scalar_prefetch=0,
                grid=grid,
                in_specs=[
                    pl.BlockSpec((tm, tv), lambda i, j: (i, j)),
                    pl.BlockSpec((tm, 1), lambda i, j: (i, 0)),
                ],
                out_specs=pl.BlockSpec((tm, tv), lambda i, j: (i, j)),
            ),
            compiler_params=pltpu.CompilerParams(
                dimension_semantics=("parallel", "parallel"),
                vmem_limit_bytes=vmem_limit,
            ),
            input_output_aliases={0: 0},   # normalize logits in place
            cost_estimate=pl.CostEstimate(
                flops=Mp * Vp, transcendentals=0,
                bytes_accessed=2 * Mp * Vp * out_bytes + Mp * 4),
        )(logits, lse)

    return out[:M, :V].reshape(*lead, V)


# ----------------------------------------------------------------------------
# Self-test
# ----------------------------------------------------------------------------
if __name__ == "__main__":
    key = jax.random.PRNGKey(0)

    # Test 1: Generator(dim_model=32, vocab=128), x (batch=2, seq=8, 32) -> slab path.
    batch, seq, dim_model, vocab = 2, 8, 32, 128
    kx, kw, kb, key = jax.random.split(key, 4)
    x = jax.random.normal(kx, (batch, seq, dim_model), dtype=jnp.float32)
    # nn.Linear(dim_model, vocab): weight (vocab, dim_model), bias (vocab,)
    weight = jax.random.normal(kw, (vocab, dim_model), dtype=jnp.float32) * 0.1
    bias = jax.random.normal(kb, (vocab,), dtype=jnp.float32) * 0.1
    w_t = weight.T  # (dim_model, vocab)

    out = jax.block_until_ready(generator_forward(x, w_t, bias))
    ref = jax.nn.log_softmax(x @ w_t + bias, axis=-1)
    assert out.shape == (batch, seq, vocab)
    assert jnp.allclose(out, ref, atol=1e-5, rtol=1e-5), \
        float(jnp.max(jnp.abs(out - ref)))

    # Test 2: uneven rows + multiple vocab tiles (M padding, 3-tile online lse, slab path).
    batch2, seq2, dim2, vocab2 = 2, 3, 32, 384
    kx, kw, kb, key = jax.random.split(key, 4)
    xb = jax.random.normal(kx, (batch2, seq2, dim2), dtype=jnp.float32)
    wb = jax.random.normal(kw, (vocab2, dim2), dtype=jnp.float32) * 0.1
    bb = jax.random.normal(kb, (vocab2,), dtype=jnp.float32) * 0.1
    ref2 = jax.nn.log_softmax(xb @ wb.T + bb, axis=-1)

    out2 = jax.block_until_ready(
        generator_forward(xb, wb.T, bb, tv_max=128, force_path="slab"))
    assert out2.shape == (batch2, seq2, vocab2)
    assert jnp.allclose(out2, ref2, atol=2e-5, rtol=1e-5), \
        float(jnp.max(jnp.abs(out2 - ref2)))

    # Test 3: same problem through the large-vocab write-then-fixup path.
    out3 = jax.block_until_ready(
        generator_forward(xb, wb.T, bb, tv_max=128, force_path="fixup"))
    assert out3.shape == (batch2, seq2, vocab2)
    assert jnp.allclose(out3, ref2, atol=2e-5, rtol=1e-5), \
        float(jnp.max(jnp.abs(out3 - ref2)))

    print("KERNEL_OK")
</pallas_src>

<mosaic_0001>
module attributes {stable_mosaic.version = 11 : i64} {
  func.func @_slab_kernel(%arg0: i32, %arg1: i32, %arg2: i32, %arg3: memref<16x32xf32, #tpu.memory_space<vmem>>, %arg4: memref<32x128xf32, #tpu.memory_space<vmem>>, %arg5: memref<1x128xf32, #tpu.memory_space<vmem>>, %arg6: memref<16x128xf32, #tpu.memory_space<vmem>>, %arg7: memref<16x128xf32, #tpu.memory_space<vmem>>, %arg8: memref<16x1xf32, #tpu.memory_space<vmem>>, %arg9: memref<16x1xf32, #tpu.memory_space<vmem>>) attributes {dimension_semantics = [#tpu.dimension_semantics<parallel>, #tpu.dimension_semantics<arbitrary>, #tpu.dimension_semantics<arbitrary>], iteration_bounds = array<i64: 1, 2, 1>, scalar_prefetch = 0 : i64, scratch_operands = 3 : i64, tpu.core_type = #tpu.core_type<tc>, window_params = [{transform_indices = @transform_0, window_bounds = array<i64: 16, 32>}, {transform_indices = @transform_1, window_bounds = array<i64: 32, 128>}, {transform_indices = @transform_2, window_bounds = array<i64: 1, 128>}, {transform_indices = @transform_3, window_bounds = array<i64: 16, 128>}]} {
    %c128_i32 = arith.constant 128 : i32
    %0 = arith.muli %arg2, %c128_i32 : i32
    %1 = tpu.assume_multiple %0, 128 : i32
    %c0_i32 = arith.constant 0 : i32
    %2 = arith.cmpi eq, %arg1, %c0_i32 : i32
    %3 = arith.extui %2 : i1 to i32
    %c0_i32_0 = arith.constant 0 : i32
    %4 = arith.cmpi ne, %3, %c0_i32_0 : i32
    scf.if %4 {
      %c0_i32_2 = arith.constant 0 : i32
      %8 = arith.cmpi eq, %arg2, %c0_i32_2 : i32
      %9 = arith.extui %8 : i1 to i32
      %c0_i32_3 = arith.constant 0 : i32
      %10 = arith.cmpi ne, %9, %c0_i32_3 : i32
      scf.if %10 {
        %cst_22 = arith.constant -1.000000e+30 : f32
        %38 = vector.broadcast %cst_22 : f32 to vector<16x1xf32>
        %c0_23 = arith.constant 0 : index
        %c0_24 = arith.constant 0 : index
        %39 = vector.load %arg8[%c0_23, %c0_24] : memref<16x1xf32, #tpu.memory_space<vmem>>, vector<16x1xf32>
        tpu.vector_store %arg8[%c0_23, %c0_24], %38 {strides = array<i32>} : memref<16x1xf32, #tpu.memory_space<vmem>>, vector<16x1xf32>,
        %cst_25 = arith.constant 0.000000e+00 : f32
        %40 = vector.broadcast %cst_25 : f32 to vector<16x1xf32>
        %c0_26 = arith.constant 0 : index
        %c0_27 = arith.constant 0 : index
        %41 = vector.load %arg9[%c0_26, %c0_27] : memref<16x1xf32, #tpu.memory_space<vmem>>, vector<16x1xf32>
        tpu.vector_store %arg9[%c0_26, %c0_27], %40 {strides = array<i32>} : memref<16x1xf32, #tpu.memory_space<vmem>>, vector<16x1xf32>,
      } else {
      }
      %c0 = arith.constant 0 : index
      %c0_4 = arith.constant 0 : index
      %11 = vector.load %arg3[%c0, %c0_4] : memref<16x32xf32, #tpu.memory_space<vmem>>, vector<16x32xf32>
      %c0_5 = arith.constant 0 : index
      %c0_6 = arith.constant 0 : index
      %12 = vector.load %arg4[%c0_5, %c0_6] : memref<32x128xf32, #tpu.memory_space<vmem>>, vector<32x128xf32>
      %cst = arith.constant dense<0.000000e+00> : vector<16x128xf32>
      %13 = tpu.matmul %11, %12, %cst {dimension_numbers = #tpu.dot_dimension_numbers<[1], [0], [0], [1], [0, 0, 1, 1], [], []>} : vector<16x32xf32>, vector<32x128xf32>, vector<16x128xf32> -> vector<16x128xf32>
      %c0_7 = arith.constant 0 : index
      %c0_8 = arith.constant 0 : index
      %14 = vector.load %arg5[%c0_7, %c0_8] : memref<1x128xf32, #tpu.memory_space<vmem>>, vector<1x128xf32>
      %15 = vector.broadcast %14 : vector<1x128xf32> to vector<16x128xf32>
      %16 = arith.addf %13, %15 : vector<16x128xf32>
      %c0_9 = arith.constant 0 : index
      %17 = arith.index_cast %1 : i32 to index
      %18 = vector.load %arg7[%c0_9, %17] : memref<16x128xf32, #tpu.memory_space<vmem>>, vector<16x128xf32>
      tpu.vector_store %arg7[%c0_9, %17], %16 {strides = array<i32>} : memref<16x128xf32, #tpu.memory_space<vmem>>, vector<16x128xf32>,
      %c0_10 = arith.constant 0 : index
      %c0_11 = arith.constant 0 : index
      %19 = vector.load %arg8[%c0_10, %c0_11] : memref<16x1xf32, #tpu.memory_space<vmem>>, vector<16x1xf32>
      %cst_12 = arith.constant dense<0xFF800000> : vector<16xf32>
      %20 = vector.multi_reduction <maximumf>, %16, %cst_12 [1] : vector<16x128xf32> to vector<16xf32>
      %21 = vector.shape_cast %20 : vector<16xf32> to vector<16x1xf32>
      %22 = arith.maximumf %19, %21 : vector<16x1xf32>
      %c0_13 = arith.constant 0 : index
      %c0_14 = arith.constant 0 : index
      %23 = vector.load %arg9[%c0_13, %c0_14] : memref<16x1xf32, #tpu.memory_space<vmem>>, vector<16x1xf32>
      %24 = arith.subf %19, %22 : vector<16x1xf32>
      %25 = math.exp %24 : vector<16x1xf32>
      %26 = arith.mulf %23, %25 : vector<16x1xf32>
      %27 = vector.broadcast %22 : vector<16x1xf32> to vector<16x128xf32>
      %28 = arith.subf %16, %27 : vector<16x128xf32>
      %29 = math.exp %28 : vector<16x128xf32>
      %cst_15 = arith.constant dense<0.000000e+00> : vector<16xf32>
      %30 = vector.multi_reduction <add>, %29, %cst_15 [1] : vector<16x128xf32> to vector<16xf32>
      %31 = vector.shape_cast %30 : vector<16xf32> to vector<16x1xf32>
      %32 = arith.addf %26, %31 : vector<16x1xf32>
      %c0_16 = arith.constant 0 : index
      %c0_17 = arith.constant 0 : index
      %33 = vector.load %arg9[%c0_16, %c0_17] : memref<16x1xf32, #tpu.memory_space<vmem>>, vector<16x1xf32>
      tpu.vector_store %arg9[%c0_16, %c0_17], %32 {strides = array<i32>} : memref<16x1xf32, #tpu.memory_space<vmem>>, vector<16x1xf32>,
      %c0_18 = arith.constant 0 : index
      %c0_19 = arith.constant 0 : index
      %34 = vector.load %arg8[%c0_18, %c0_19] : memref<16x1xf32, #tpu.memory_space<vmem>>, vector<16x1xf32>
      tpu.vector_store %arg8[%c0_18, %c0_19], %22 {strides = array<i32>} : memref<16x1xf32, #tpu.memory_space<vmem>>, vector<16x1xf32>,
      %c0_i32_20 = arith.constant 0 : i32
      %35 = arith.cmpi eq, %arg2, %c0_i32_20 : i32
      %36 = arith.extui %35 : i1 to i32
      %c0_i32_21 = arith.constant 0 : i32
      %37 = arith.cmpi ne, %36, %c0_i32_21 : i32
      scf.if %37 {
        %c0_22 = arith.constant 0 : index
        %c0_23 = arith.constant 0 : index
        %38 = vector.load %arg8[%c0_22, %c0_23] : memref<16x1xf32, #tpu.memory_space<vmem>>, vector<16x1xf32>
        %c0_24 = arith.constant 0 : index
        %c0_25 = arith.constant 0 : index
        %39 = vector.load %arg9[%c0_24, %c0_25] : memref<16x1xf32, #tpu.memory_space<vmem>>, vector<16x1xf32>
        %40 = math.log %39 : vector<16x1xf32>
        %41 = arith.addf %38, %40 : vector<16x1xf32>
        %c0_26 = arith.constant 0 : index
        %c0_27 = arith.constant 0 : index
        %42 = vector.load %arg8[%c0_26, %c0_27] : memref<16x1xf32, #tpu.memory_space<vmem>>, vector<16x1xf32>
        tpu.vector_store %arg8[%c0_26, %c0_27], %41 {strides = array<i32>} : memref<16x1xf32, #tpu.memory_space<vmem>>, vector<16x1xf32>,
      } else {
      }
    } else {
    }
    %c1_i32 = arith.constant 1 : i32
    %5 = arith.cmpi eq, %arg1, %c1_i32 : i32
    %6 = arith.extui %5 : i1 to i32
    %c0_i32_1 = arith.constant 0 : i32
    %7 = arith.cmpi ne, %6, %c0_i32_1 : i32
    scf.if %7 {
      %c0 = arith.constant 0 : index
      %8 = arith.index_cast %1 : i32 to index
      %9 = vector.load %arg7[%c0, %8] : memref<16x128xf32, #tpu.memory_space<vmem>>, vector<16x128xf32>
      %c0_2 = arith.constant 0 : index
      %c0_3 = arith.constant 0 : index
      %10 = vector.load %arg8[%c0_2, %c0_3] : memref<16x1xf32, #tpu.memory_space<vmem>>, vector<16x1xf32>
      %11 = vector.broadcast %10 : vector<16x1xf32> to vector<16x128xf32>
      %12 = arith.subf %9, %11 : vector<16x128xf32>
      %c0_4 = arith.constant 0 : index
      %c0_5 = arith.constant 0 : index
      %13 = vector.load %arg6[%c0_4, %c0_5] : memref<16x128xf32, #tpu.memory_space<vmem>>, vector<16x128xf32>
      tpu.vector_store %arg6[%c0_4, %c0_5], %12 {strides = array<i32>} : memref<16x128xf32, #tpu.memory_space<vmem>>, vector<16x128xf32>,
    } else {
    }
    return
  }
  func.func @transform_0(%arg0: i32, %arg1: i32, %arg2: i32) -> (i32, i32) {
    %c0_i32 = arith.constant 0 : i32
    %c0_i32_0 = arith.constant 0 : i32
    return %arg0, %c0_i32 : i32, i32
  }
  func.func @transform_1(%arg0: i32, %arg1: i32, %arg2: i32) -> (i32, i32) {
    %c1_i32 = arith.constant 1 : i32
    %0 = arith.subi %c1_i32, %arg1 : i32
    %1 = arith.muli %arg2, %0 : i32
    %c0_i32 = arith.constant 0 : i32
    %2 = arith.muli %c0_i32, %arg1 : i32
    %3 = arith.addi %1, %2 : i32
    %c0_i32_0 = arith.constant 0 : i32
    %c0_i32_1 = arith.constant 0 : i32
    return %c0_i32_0, %3 : i32, i32
  }
  func.func @transform_2(%arg0: i32, %arg1: i32, %arg2: i32) -> (i32, i32) {
    %c1_i32 = arith.constant 1 : i32
    %0 = arith.subi %c1_i32, %arg1 : i32
    %1 = arith.muli %arg2, %0 : i32
    %c0_i32 = arith.constant 0 : i32
    %2 = arith.muli %c0_i32, %arg1 : i32
    %3 = arith.addi %1, %2 : i32
    %c0_i32_0 = arith.constant 0 : i32
    %c0_i32_1 = arith.constant 0 : i32
    return %c0_i32_0, %3 : i32, i32
  }
  func.func @transform_3(%arg0: i32, %arg1: i32, %arg2: i32) -> (i32, i32) {
    %0 = arith.muli %arg2, %arg1 : i32
    %c0_i32 = arith.constant 0 : i32
    return %arg0, %0 : i32, i32
  }
}

</mosaic_0001>

<llo_original>
// kernel: tpu_custom_call.1
$region0: #{tpu_custom_call.1}
  #allocation0 [shape = 'u32[]', space=smem, size = 0x4, offset = 0x4, fixed_abs, tag = 'smem constant byte address 0x4 - core index']
  #allocation1 [shape = 'u32[144,128]{1,0:T(1,128)}', space=vmem, size = 0x12000, scoped, tag = 'internal scratch']
  #allocation2 [shape = 'f32[16,128]{1,0:T(8,128)}', space=vmem, size = 0x2000, scoped, tag = 'scratch operand']
  #allocation3 [shape = 'f32[16,1]{1,0:T(8,128)}', space=vmem, size = 0x2000, scoped, tag = 'scratch operand']
  #allocation4 [shape = 'f32[16,1]{1,0:T(8,128)}', space=vmem, size = 0x2000, scoped, tag = 'scratch operand']
  %s0 = inlined_call_operand.hbm [shape: f32[16,32], index: 0, kind: input, shape index: {}]
  %s1 = inlined_call_operand.hbm [shape: f32[32,128], index: 1, kind: input, shape index: {}]
  %s2 = inlined_call_operand.hbm [shape: f32[1,128], index: 2, kind: input, shape index: {}]
  %s3 = inlined_call_operand.hbm [shape: f32[16,128], index: 3, kind: output, shape index: {}]
  %s4 = sld [smem:[#allocation0]]
  $region73: #{tpu_custom_call.1} parent=0
    _
  %s6 = ssub.s32 1, %s4
  %s7 = scalar_select 0, %s6, %s4
  $region1: #{tpu_custom_call.1} parent=0
    #allocation5 [shape = 'u8[8192]{0}', space=vmem, size = 0x2000, scoped, tag = 'input window, operand 0, single buffered']
    #allocation6 [shape = 's32[2]{0}', space=sflag, size = 0x8, scoped, tag = 'scoped memory for tpu_custom_call.1']
    #allocation7 [shape = 's32[2]{0}', space=sflag, size = 0x8, scoped, tag = 'scoped memory for tpu_custom_call.1']
    #allocation8 [shape = 'u8[32768]{0}', space=vmem, size = 0x8000, scoped, tag = 'input window, operand 1']
    #allocation9 [shape = 's32[2]{0}', space=sflag, size = 0x8, scoped, tag = 'scoped memory for tpu_custom_call.1']
    #allocation10 [shape = 'u8[1024]{0}', space=vmem, size = 0x400, scoped, tag = 'input window, operand 2']
    #allocation11 [shape = 'u8[16384]{0}', space=vmem, size = 0x4000, scoped, tag = 'output window, operand 0']
    %8 = vsyncpa [#allocation6], 0
    %9 = vsyncpa [#allocation9], 0
    %s10 = scalar_lea.sflag [#allocation9], 1
    %11 = vsyncpa %s10, 0
    %12 = vsyncpa [#allocation7], 0
    %s13 = scalar_lea.sflag [#allocation7], 1
    %14 = vsyncpa %s13, 0
    loop: start=0, step=1, limit=4
    $region2: #{tpu_custom_call.1} parent=1 // loop_pre_header
      _
    $region3: #{tpu_custom_call.1} parent=1 // loop_header
      %s16 = sphi 0, %s20
      %p17 = scmp.ge.s32.totalorder %s16, 4
      %s23 = sphi 0, %s42
      %s24 = sphi 0, %s38
      %s25 = sphi 0, %s34
      %s26 = sphi 0, %s23
      %s27 = sphi 0, %s24
      %s28 = sphi 0, %s25
      %s29 = sphi 0, %s26
      %s30 = sphi 0, %s27
      %s31 = sphi 0, %s28
      %s45 = sphi 0, %s47
      %s48 = sphi 0, %s45
      %s49 = sphi 0, %s48
      %s65 = sphi 0, %s49
      %s75 = sphi 0, %s77
      %s78 = sphi 0, %s75
      %s79 = sphi 0, %s78
      %s95 = sphi 0, %s79
      %s105 = sphi 0, %s107
      %s108 = sphi 0, %s105
      %s109 = sphi 0, %s108
      %s125 = sphi 0, %s109
      %s135 = sphi 0, %s137
      %s138 = sphi 0, %s135
      %s139 = sphi 0, %s138
      %s155 = sphi 0, %s139
    $region4: #{tpu_custom_call.1} parent=1 // loop_header_branch
      %19 = sbr.rel (%p17) target = $region8
    $region5: #{tpu_custom_call.1} parent=1 // loop_body
      %s21 = ssub.s32 %s16, 1
      %s22 = ssub.s32 %s16, 2
      %s32 = sadd.s32 1, %s25
      %p33 = scmp.ge.s32.totalorder %s32, 1
      %s34 = scalar_select %p33, 0, %s32
      %s35 = sadd.s32 1, %s24
      %s36 = scalar_select %p33, %s35, %s24
      %p37 = scmp.ge.s32.totalorder %s36, 2
      %s38 = scalar_select %p37, 0, %s36
      %s39 = sadd.s32 1, %s23
      %s40 = scalar_select %p37, %s39, %s23
      %p41 = scmp.ge.s32.totalorder %s40, 1
      %s42 = scalar_select %p41, 0, %s40
      %s43 = ssub.s32 %s23, %s42
      %p44 = scmp.eq.s32.totalorder %s43, 0
      %s46 = sadd.s32 %s45, 1
      %s47 = scalar_select %p44, %s45, %s46
      %p50 = pneg %p44
      %p51 = scmp.eq.s32.totalorder %s16, 1
      %p52 = por %p50, %p51
      %p53 = scmp.ne.s32.totalorder %s45, %s48
      %p54 = scmp.eq.s32.totalorder %s16, 0
      %p55 = por %p53, %p54
      %p56 = scmp.ne.s32.totalorder %s45, %s48
      %p57 = scmp.eq.s32.totalorder %s21, 1
      %p58 = por %p56, %p57
      %p59 = scmp.ne.s32.totalorder %s48, %s49
      %p60 = scmp.eq.s32.totalorder %s21, 0
      %p61 = por %p59, %p60
      %p62 = scmp.ne.s32.totalorder %s48, %s49
      %p63 = scmp.eq.s32.totalorder %s22, 1
      %p64 = por %p62, %p63
      %p66 = scmp.ne.s32.totalorder %s49, %s65
      %p67 = scmp.eq.s32.totalorder %s22, 0
      %p68 = por %p66, %p67
      %s69 = ssub.s32 1, %s24
      %s70 = smul.u32 %s25, %s69
      %s71 = ssub.s32 1, %s38
      %s72 = smul.u32 %s34, %s71
      %s73 = ssub.s32 %s70, %s72
      %p74 = scmp.eq.s32.totalorder %s73, 0
      %s76 = sadd.s32 %s75, 1
      %s77 = scalar_select %p74, %s75, %s76
      %p80 = pneg %p74
      %p81 = scmp.eq.s32.totalorder %s16, 1
      %p82 = por %p80, %p81
      %p83 = scmp.ne.s32.totalorder %s75, %s78
      %p84 = scmp.eq.s32.totalorder %s16, 0
      %p85 = por %p83, %p84
      %p86 = scmp.ne.s32.totalorder %s75, %s78
      %p87 = scmp.eq.s32.totalorder %s21, 1
      %p88 = por %p86, %p87
      %p89 = scmp.ne.s32.totalorder %s78, %s79
      %p90 = scmp.eq.s32.totalorder %s21, 0
      %p91 = por %p89, %p90
      %p92 = scmp.ne.s32.totalorder %s78, %s79
      %p93 = scmp.eq.s32.totalorder %s22, 1
      %p94 = por %p92, %p93
      %p96 = scmp.ne.s32.totalorder %s79, %s95
      %p97 = scmp.eq.s32.totalorder %s22, 0
      %p98 = por %p96, %p97
      %s99 = ssub.s32 1, %s24
      %s100 = smul.u32 %s25, %s99
      %s101 = ssub.s32 1, %s38
      %s102 = smul.u32 %s34, %s101
      %s103 = ssub.s32 %s100, %s102
      %p104 = scmp.eq.s32.totalorder %s103, 0
      %s106 = sadd.s32 %s105, 1
      %s107 = scalar_select %p104, %s105, %s106
      %p110 = pneg %p104
      %p111 = scmp.eq.s32.totalorder %s16, 1
      %p112 = por %p110, %p111
      %p113 = scmp.ne.s32.totalorder %s105, %s108
      %p114 = scmp.eq.s32.totalorder %s16, 0
      %p115 = por %p113, %p114
      %p116 = scmp.ne.s32.totalorder %s105, %s108
      %p117 = scmp.eq.s32.totalorder %s21, 1
      %p118 = por %p116, %p117
      %p119 = scmp.ne.s32.totalorder %s108, %s109
      %p120 = scmp.eq.s32.totalorder %s21, 0
      %p121 = por %p119, %p120
      %p122 = scmp.ne.s32.totalorder %s108, %s109
      %p123 = scmp.eq.s32.totalorder %s22, 1
      %p124 = por %p122, %p123
      %p126 = scmp.ne.s32.totalorder %s109, %s125
      %p127 = scmp.eq.s32.totalorder %s22, 0
      %p128 = por %p126, %p127
      %s129 = smul.u32 %s25, %s24
      %s130 = smul.u32 %s34, %s38
      %s131 = ssub.s32 %s23, %s42
      %s132 = ssub.s32 %s129, %s130
      %s133 = sor.u32 %s131, %s132
      %p134 = scmp.eq.s32.totalorder %s133, 0
      %s136 = sadd.s32 %s135, 1
      %s137 = scalar_select %p134, %s135, %s136
      %p140 = pneg %p134
      %p141 = scmp.eq.s32.totalorder %s16, 1
      %p142 = por %p140, %p141
      %p143 = scmp.ne.s32.totalorder %s135, %s138
      %p144 = scmp.eq.s32.totalorder %s16, 0
      %p145 = por %p143, %p144
      %p146 = scmp.ne.s32.totalorder %s135, %s138
      %p147 = scmp.eq.s32.totalorder %s21, 1
      %p148 = por %p146, %p147
      %p149 = scmp.ne.s32.totalorder %s138, %s139
      %p150 = scmp.eq.s32.totalorder %s21, 0
      %p151 = por %p149, %p150
      %p152 = scmp.ne.s32.totalorder %s138, %s139
      %p153 = scmp.eq.s32.totalorder %s22, 1
      %p154 = por %p152, %p153
      %p156 = scmp.ne.s32.totalorder %s139, %s155
      %p157 = scmp.eq.s32.totalorder %s22, 0
      %p158 = por %p156, %p157
      %p159 = scmp.le.s32.totalorder 1, %s16
      %p160 = scmp.lt.s32.totalorder %s16, 3
      %p161 = pnand %p159, %p160
      %p162 = pneg %p161
      // Predicated region
      $region9: #{tpu_custom_call.1} parent=5 // pred_check
        _
      $region10: #{tpu_custom_call.1} parent=5 // pred_check_branch
        %164 = sbr.rel (%p161) target = $region12
      $region11: #{tpu_custom_call.1} parent=5 // pred_region
        %s165 = ssub.s32 %s16, 1
        // Predicated region
        $region13: #{tpu_custom_call.1} parent=11 // pred_check
          %p166 = pneg %p61
        $region14: #{tpu_custom_call.1} parent=11 // pred_check_branch
          %168 = sbr.rel (%p166) target = $region16
        $region15: #{tpu_custom_call.1} parent=11 // pred_region
          %s169 = smul.u32 2, %s26
          %s171 = ssub.s32 256, 256
          %172 = vsyncadd [#allocation6], %s171
          %s173 = smul.addr %s169, 128
          %s174 = scalar_lea.hbm %s0, %s173
          %s175 = sshll.u32 [#allocation5], 4
          %s176 = int_to_ptr.vmem [resolvable:$true] %s175
          %181 = dma.hbm_to_vmem [thread:$0]  %s174, 256, %s176, [#allocation6], 128, 128, 8
        $region16: #{tpu_custom_call.1} parent=11 // pred_fallthru
          _
      $region12: #{tpu_custom_call.1} parent=5 // pred_fallthru
        _
      %p182 = scmp.lt.s32.totalorder %s16, 2
      // Predicated region
      $region17: #{tpu_custom_call.1} parent=5 // pred_check
        %p183 = pneg %p182
      $region18: #{tpu_custom_call.1} parent=5 // pred_check_branch
        %185 = sbr.rel (%p183) target = $region20
      $region19: #{tpu_custom_call.1} parent=5 // pred_region
        // Predicated region
        $region21: #{tpu_custom_call.1} parent=19 // pred_check
          %p186 = pneg %p85
        $region22: #{tpu_custom_call.1} parent=19 // pred_check_branch
          %188 = sbr.rel (%p186) target = $region24
        $region23: #{tpu_custom_call.1} parent=19 // pred_region
          %s189 = sand.u32 %s16, 1
          %s190 = scalar_lea.sflag [#allocation9], %s189
          %s191 = sand.u32 %s75, 1
          %s192 = smul.addr %s191, 32
          %s193 = scalar_lea.vmem [#allocation8], %s192
          %s194 = ssub.s32 1, %s24
          %s195 = smul.u32 %s25, %s194
          %s197 = ssub.s32 512, 512
          %198 = vsyncadd %s190, %s197
          %s199 = smul.addr %s195, 128
          %s200 = scalar_lea.hbm %s1, %s199
          %s201 = sshll.u32 %s193, 4
          %s202 = int_to_ptr.vmem [resolvable:$true] %s201
          %207 = dma.hbm_to_vmem [thread:$0]  %s200, 512, %s202, %s190, 128, 128, 8
        $region24: #{tpu_custom_call.1} parent=19 // pred_fallthru
          _
        // Predicated region
        $region25: #{tpu_custom_call.1} parent=19 // pred_check
          %p208 = pneg %p115
        $region26: #{tpu_custom_call.1} parent=19 // pred_check_branch
          %210 = sbr.rel (%p208) target = $region28
        $region27: #{tpu_custom_call.1} parent=19 // pred_region
          %s211 = sand.u32 %s16, 1
          %s212 = scalar_lea.sflag [#allocation9], %s211
          %s213 = sand.u32 %s105, 1
          %s214 = scalar_lea.vmem [#allocation10], %s213
          %s215 = ssub.s32 1, %s24
          %s216 = smul.u32 %s25, %s215
          %s218 = ssub.s32 16, 16
          %219 = vsyncadd %s212, %s218
          %s220 = smul.addr %s216, 16
          %s221 = scalar_lea.hbm %s2, %s220
          %s223 = sshll.u32 %s214, 4
          %s224 = int_to_ptr.vmem [resolvable:$true] %s223
          %226 = dma.hbm_to_vmem [thread:$0]  %s221, 16, %s224, %s212
        $region28: #{tpu_custom_call.1} parent=19 // pred_fallthru
          _
      $region20: #{tpu_custom_call.1} parent=5 // pred_fallthru
        _
      %p227 = scmp.le.s32.totalorder 1, %s16
      %p228 = scmp.lt.s32.totalorder %s16, 3
      %p229 = pnand %p227, %p228
      %p230 = pneg %p229
      // Predicated region
      $region29: #{tpu_custom_call.1} parent=5 // pred_check
        _
      $region30: #{tpu_custom_call.1} parent=5 // pred_check_branch
        %232 = sbr.rel (%p229) target = $region32
      $region31: #{tpu_custom_call.1} parent=5 // pred_region
        %s233 = ssub.s32 %s16, 1
        // Predicated region
        $region33: #{tpu_custom_call.1} parent=31 // pred_check
          %p234 = pneg %p61
        $region34: #{tpu_custom_call.1} parent=31 // pred_check_branch
          %236 = sbr.rel (%p234) target = $region36
        $region35: #{tpu_custom_call.1} parent=31 // pred_region
          %237 = dma.done [#allocation6], 256
        $region36: #{tpu_custom_call.1} parent=31 // pred_fallthru
          _
        %s238 = sand.u32 %s21, 1
        %s239 = scalar_lea.sflag [#allocation9], %s238
        %s240 = sand.u32 %s78, 1
        %s241 = smul.addr %s240, 32
        %s242 = scalar_lea.vmem [#allocation8], %s241
        // Predicated region
        $region37: #{tpu_custom_call.1} parent=31 // pred_check
          %p243 = pneg %p91
        $region38: #{tpu_custom_call.1} parent=31 // pred_check_branch
          %245 = sbr.rel (%p243) target = $region40
        $region39: #{tpu_custom_call.1} parent=31 // pred_region
          %246 = dma.done %s239, 512
        $region40: #{tpu_custom_call.1} parent=31 // pred_fallthru
          _
        %s247 = sand.u32 %s21, 1
        %s248 = scalar_lea.sflag [#allocation9], %s247
        %s249 = sand.u32 %s108, 1
        %s250 = scalar_lea.vmem [#allocation10], %s249
        // Predicated region
        $region41: #{tpu_custom_call.1} parent=31 // pred_check
          %p251 = pneg %p121
        $region42: #{tpu_custom_call.1} parent=31 // pred_check_branch
          %253 = sbr.rel (%p251) target = $region44
        $region43: #{tpu_custom_call.1} parent=31 // pred_region
          %254 = dma.done %s248, 16
        $region44: #{tpu_custom_call.1} parent=31 // pred_fallthru
          _
        %p255 = pneg %p61
        %p256 = pneg %p58
        %s257 = sand.u32 %s21, 1
        %s258 = scalar_lea.sflag [#allocation9], %s257
        %s259 = sand.u32 %s78, 1
        %s260 = smul.addr %s259, 32
        %s261 = scalar_lea.vmem [#allocation8], %s260
        %p262 = pneg %p91
        %p263 = pneg %p88
        %s264 = sand.u32 %s21, 1
        %s265 = scalar_lea.sflag [#allocation9], %s264
        %s266 = sand.u32 %s108, 1
        %s267 = scalar_lea.vmem [#allocation10], %s266
        %p268 = pneg %p121
        %p269 = pneg %p118
        %p270 = pneg %p151
        %p271 = pneg %p148
        %s272 = sand.u32 %s138, 1
        %s273 = scalar_lea.sflag [#allocation7], %s272
        %s274 = sand.u32 %s138, 1
        %s275 = smul.addr %s274, 16
        %s276 = scalar_lea.vmem [#allocation11], %s275
        %s277 = smul.u32 2, %s26
        %s278 = ssub.s32 1, %s27
        %s279 = smul.u32 %s28, %s278
        %s280 = ssub.s32 1, %s27
        %s281 = smul.u32 %s28, %s280
        %s282 = smul.u32 %s28, %s27
        %s283 = smul.u32 2, %s26
        %s284 = smul.u32 %s28, 128
        %p285 = scmp.eq.s32.totalorder %s27, 0
        // Predicated region
        $region45: #{tpu_custom_call.1} parent=31 // pred_check
          %p286 = pneg %p285
        $region46: #{tpu_custom_call.1} parent=31 // pred_check_branch
          %288 = sbr.rel (%p286) target = $region48
        $region47: #{tpu_custom_call.1} parent=31 // pred_region
          %p289 = scmp.eq.s32.totalorder %s28, 0
          // Predicated region
          $region49: #{tpu_custom_call.1} parent=47 // pred_check
            %p290 = pneg %p289
          $region50: #{tpu_custom_call.1} parent=47 // pred_check_branch
            %292 = sbr.rel (%p290) target = $region52
          $region51: #{tpu_custom_call.1} parent=47 // pred_region
            %vm293 = vcmask 7168
            %294 = vst.msk [vmem:[#allocation3] sm:$0xff] %vm293, -1e+30
            %295 = vst.msk [vmem:[#allocation3 + $0x8] sm:$0xff] %vm293, -1e+30
            %296 = vst.msk [vmem:[#allocation4] sm:$0xff] %vm293, 0.0
            %297 = vst.msk [vmem:[#allocation4 + $0x8] sm:$0xff] %vm293, 0.0
          $region52: #{tpu_custom_call.1} parent=47 // pred_fallthru
            _
          %v298 = vld [vmem:[#allocation5] sm:$0xff]
          %v299 = vld [vmem:[#allocation5 + $0x8] sm:$0xff]
          %v300 = vld [vmem:[%s242] sm:$0xff]
          %v301 = vld [vmem:[%s242 + $0x8] sm:$0xff]
          %v302 = vld [vmem:[%s242 + $0x10] sm:$0xff]
          %v303 = vld [vmem:[%s242 + $0x18] sm:$0xff]
          %v304 = vld [vmem:[%s250] sm:$0x1]
          %v306 = vlaneseq
          %v307 = vshrl.u32 %v306, 7
          %v308 = vsub.s32 0, %v307
          %v309 = vrot.slane %v304, %v308
          %vm311 = vcmask 261120
          %v313 = vsel %vm311, %v298, 0
          %v316 = vsel %vm311, %v299, 0
          %318 = vmatprep.subr.mxu0 0.0
          %319 = vmatpush1.msra.mxu0 %v300
          %320 = vmatprep.subr.mxu0 0.0
          %321 = vmatpush1.msra.mxu0 %v301
          %322 = vmatprep.subr.mxu0 0.0
          %323 = vmatpush1.msra.mxu0 %v302
          %324 = vmatprep.subr.mxu0 0.0
          %325 = vmatpush1.msra.mxu0 %v303
          %326 = vmatprep.subr.mxu0 0.0
          %327 = vmatpush1.msra.mxu0 0.0
          %328 = vmatprep.subr.mxu0 0.0
          %329 = vmatpush1.msra.mxu0 0.0
          %330 = vmatprep.subr.mxu0 0.0
          %331 = vmatpush1.msra.mxu0 0.0
          %332 = vmatprep.subr.mxu0 0.0
          %333 = vmatpush1.msra.mxu0 0.0
          %334 = vmatprep.subr.mxu0 0.0
          %335 = vmatpush1.msra.mxu0 0.0
          %336 = vmatprep.subr.mxu0 0.0
          %337 = vmatpush1.msra.mxu0 0.0
          %338 = vmatprep.subr.mxu0 0.0
          %339 = vmatpush1.msra.mxu0 0.0
          %340 = vmatprep.subr.mxu0 0.0
          %341 = vmatpush1.msra.mxu0 0.0
          %342 = vmatprep.subr.mxu0 0.0
          %343 = vmatpush1.msra.mxu0 0.0
          %344 = vmatprep.subr.mxu0 0.0
          %345 = vmatpush1.msra.mxu0 0.0
          %346 = vmatprep.subr.mxu0 0.0
          %347 = vmatpush1.msra.mxu0 0.0
          %348 = vmatprep.subr.mxu0 0.0
          %349 = vmatpush1.msra.mxu0 0.0
          %350 = vmatprep.subr.mxu0 0.0
          %351 = vmatpush1.msra.mxu0 0.0
          %352 = vmatprep.subr.mxu0 0.0
          %353 = vmatpush1.msra.mxu0 0.0
          %354 = vmatprep.subr.mxu0 0.0
          %355 = vmatpush1.msra.mxu0 0.0
          %356 = vmatprep.subr.mxu0 0.0
          %357 = vmatpush1.msra.mxu0 0.0
          %358 = vmatprep.subr.mxu0 0.0
          %359 = vmatpush1.msra.mxu0 0.0
          %360 = vmatprep.subr.mxu0 0.0
          %361 = vmatpush1.msra.mxu0 0.0
          %362 = vmatprep.subr.mxu0 0.0
          %363 = vmatpush1.msra.mxu0 0.0
          %364 = vmatprep.subr.mxu0 0.0
          %365 = vmatpush1.msra.mxu0 0.0
          %366 = vmatprep.subr.mxu0 0.0
          %367 = vmatpush1.msra.mxu0 0.0
          %368 = vmatprep.subr.mxu0 0.0
          %369 = vmatpush1.msra.mxu0 0.0
          %370 = vmatprep.subr.mxu0 0.0
          %371 = vmatpush1.msra.mxu0 0.0
          %372 = vmatprep.subr.mxu0 0.0
          %373 = vmatpush1.msra.mxu0 0.0
          %374 = vmatprep.subr.mxu0 0.0
          %375 = vmatpush1.msra.mxu0 0.0
          %376 = vmatprep.subr.mxu0 0.0
          %377 = vmatpush1.msra.mxu0 0.0
          %378 = vmatprep.subr.mxu0 0.0
          %379 = vmatpush1.msra.mxu0 0.0
          %380 = vmatprep.subr.mxu0 0.0
          %381 = vmatpush1.msra.mxu0 0.0
          %382 = vmatprep.mubr.f32.mxu0 0.0
          %383 = vmatmul.mubr.f32.gmra.mrb[0].mxu0 %v313
          %v384 = vpop.f32.mrb[0].mxu0
          %v385 = vadd.f32 %v309, %v384
          %v386 = vpop.f32.mrb[0].mxu0
          %387 = vmatprep.mubr.f32.mxu0 0.0
          %388 = vmatmul.mubr.f32.gmra.mrb[0].mxu0 %v316
          %v389 = vpop.f32.mrb[0].mxu0
          %v390 = vadd.f32 %v309, %v389
          %v391 = vpop.f32.mrb[0].mxu0
          %392 = vdwg.mxu0
          %s393 = sshra.s32 %s284, 7
          %s394 = sand.u32 %s284, 127
          %s395 = scalar_lea.vmem [#allocation2], %s393
          %396 = vst [vmem:[%s395] sm:$0xff] %v385
          %397 = vst [vmem:[%s395 + $0x8] sm:$0xff] %v390
          %v398 = vld [vmem:[#allocation3] sm:$0xff]
          %v399 = vld [vmem:[#allocation3 + $0x8] sm:$0xff]
          %400 = vmax.xlane.f32.xlu0 %v385
          %v401 = vpop.xlane.xlu0 %400
          %402 = vmax.xlane.f32.xlu0 %v390
          %v403 = vpop.xlane.xlu0 %402
          %v404 = vmax.f32 %v398, %v401
          %v405 = vmax.f32 %v399, %v403
          %v406 = vld [vmem:[#allocation4] sm:$0xff]
          %v407 = vld [vmem:[#allocation4 + $0x8] sm:$0xff]
          %v408 = vsub.f32 %v398, %v404
          %v409 = vsub.f32 %v399, %v405
          %v410 = vmul.f32 %v408, 1.442695
          %v411 = vpow.pop %v410
          %v412 = vmul.f32 %v409, 1.442695
          %v413 = vpow.pop %v412
          %v414 = vmul.f32 %v406, %v411
          %v415 = vmul.f32 %v407, %v413
          %417 = vset.pattern.permute.xlu0 0
          %418 = vperm.xlu0 %417, %v404
          %v419 = vpop.permute.xlu0 %418
          %422 = vset.pattern.permute.xlu0 0
          %423 = vperm.xlu0 %422, %v405
          %v424 = vpop.permute.xlu0 %423
          %v426 = vsub.f32 %v385, %v419
          %v427 = vsub.f32 %v390, %v424
          %v428 = vmul.f32 %v426, 1.442695
          %v429 = vpow.pop %v428
          %v430 = vmul.f32 %v427, 1.442695
          %v431 = vpow.pop %v430
          %432 = vadd.xlane.f32.xlu0 %v429
          %v433 = vpop.xlane.xlu0 %432
          %434 = vadd.xlane.f32.xlu0 %v431
          %v435 = vpop.xlane.xlu0 %434
          %v436 = vadd.f32 %v414, %v433
          %v437 = vadd.f32 %v415, %v435
          %vm438 = vcmask 7168
          %439 = vst.msk [vmem:[#allocation4] sm:$0xff] %vm438, %v436
          %440 = vst.msk [vmem:[#allocation4 + $0x8] sm:$0xff] %vm438, %v437
          %441 = vst.msk [vmem:[#allocation3] sm:$0xff] %vm438, %v404
          %442 = vst.msk [vmem:[#allocation3 + $0x8] sm:$0xff] %vm438, %v405
          // Predicated region
          $region53: #{tpu_custom_call.1} parent=47 // pred_check
            %p443 = pneg %p289
          $region54: #{tpu_custom_call.1} parent=47 // pred_check_branch
            %445 = sbr.rel (%p443) target = $region56
          $region55: #{tpu_custom_call.1} parent=47 // pred_region
            %v446 = vld [vmem:[#allocation3] sm:$0xff]
            %v447 = vld [vmem:[#allocation3 + $0x8] sm:$0xff]
            %v448 = vld [vmem:[#allocation4] sm:$0xff]
            %v449 = vld [vmem:[#allocation4 + $0x8] sm:$0xff]
            %v450 = vlog2.pop %v448
            %v451 = vmul.f32 %v450, 0.6931472
            %v452 = vlog2.pop %v449
            %v453 = vmul.f32 %v452, 0.6931472
            %v454 = vadd.f32 %v446, %v451
            %v455 = vadd.f32 %v447, %v453
            %456 = vst.msk [vmem:[#allocation3] sm:$0xff] %vm438, %v454
            %457 = vst.msk [vmem:[#allocation3 + $0x8] sm:$0xff] %vm438, %v455
          $region56: #{tpu_custom_call.1} parent=47 // pred_fallthru
            _
        $region48: #{tpu_custom_call.1} parent=31 // pred_fallthru
          _
        %p458 = scmp.eq.s32.totalorder %s27, 1
        // Predicated region
        $region57: #{tpu_custom_call.1} parent=31 // pred_check
          %p459 = pneg %p458
        $region58: #{tpu_custom_call.1} parent=31 // pred_check_branch
          %461 = sbr.rel (%p459) target = $region60
        $region59: #{tpu_custom_call.1} parent=31 // pred_region
          %s462 = sshra.s32 %s284, 7
          %s463 = sand.u32 %s284, 127
          %s464 = scalar_lea.vmem [#allocation2], %s462
          %v465 = vld [vmem:[%s464] sm:$0xff]
          %v466 = vld [vmem:[%s464 + $0x8] sm:$0xff]
          %v467 = vld [vmem:[#allocation3] sm:$0xff]
          %v468 = vld [vmem:[#allocation3 + $0x8] sm:$0xff]
          %470 = vset.pattern.permute.xlu0 0
          %471 = vperm.xlu0 %470, %v467
          %v472 = vpop.permute.xlu0 %471
          %475 = vset.pattern.permute.xlu0 0
          %476 = vperm.xlu0 %475, %v468
          %v477 = vpop.permute.xlu0 %476
          %v479 = vsub.f32 %v465, %v472
          %v480 = vsub.f32 %v466, %v477
          %481 = vst [vmem:[%s276] sm:$0xff] %v479
          %482 = vst [vmem:[%s276 + $0x8] sm:$0xff] %v480
        $region60: #{tpu_custom_call.1} parent=31 // pred_fallthru
          _
        %s483 = sand.u32 %s138, 1
        %s484 = scalar_lea.sflag [#allocation7], %s483
        %s485 = sand.u32 %s138, 1
        %s486 = smul.addr %s485, 16
        %s487 = scalar_lea.vmem [#allocation11], %s486
        // Predicated region
        $region61: #{tpu_custom_call.1} parent=31 // pred_check
          %p488 = pneg %p148
        $region62: #{tpu_custom_call.1} parent=31 // pred_check_branch
          %490 = sbr.rel (%p488) target = $region64
        $region63: #{tpu_custom_call.1} parent=31 // pred_region
          %s491 = smul.u32 %s28, %s27
          %s492 = smul.u32 2, %s26
          %s494 = ssub.s32 256, 256
          %495 = vsyncadd %s484, %s494
          %s496 = sadd.s32 %s491, %s492
          %s497 = smul.addr %s496, 128
          %s498 = scalar_lea.hbm %s3, %s497
          %s499 = sshll.u32 %s487, 4
          %s500 = int_to_ptr.vmem [resolvable:$true] %s499
          %505 = dma.vmem_to_hbm [thread:$0]  %s500, 256, %s498, %s484, 128, 128, 8
        $region64: #{tpu_custom_call.1} parent=31 // pred_fallthru
          _
      $region32: #{tpu_custom_call.1} parent=5 // pred_fallthru
        _
      %p506 = scmp.le.s32.totalorder 2, %s16
      // Predicated region
      $region65: #{tpu_custom_call.1} parent=5 // pred_check
        %p507 = pneg %p506
      $region66: #{tpu_custom_call.1} parent=5 // pred_check_branch
        %509 = sbr.rel (%p507) target = $region68
      $region67: #{tpu_custom_call.1} parent=5 // pred_region
        %s510 = ssub.s32 %s16, 2
        // Predicated region
        $region69: #{tpu_custom_call.1} parent=67 // pred_check
          %p511 = pneg %p154
        $region70: #{tpu_custom_call.1} parent=67 // pred_check_branch
          %513 = sbr.rel (%p511) target = $region72
        $region71: #{tpu_custom_call.1} parent=67 // pred_region
          %s514 = sand.u32 %s139, 1
          %s515 = scalar_lea.sflag [#allocation7], %s514
          %s516 = sand.u32 %s139, 1
          %s517 = smul.addr %s516, 16
          %s518 = scalar_lea.vmem [#allocation11], %s517
          %519 = dma.done %s515, 256
        $region72: #{tpu_custom_call.1} parent=67 // pred_fallthru
          _
      $region68: #{tpu_custom_call.1} parent=5 // pred_fallthru
        _
    $region6: #{tpu_custom_call.1} parent=1 // loop_footer
      %s20 = sadd.s32 1, %s16
    $region7: #{tpu_custom_call.1} parent=1 // loop_footer_branch
      %15 = sbr.rel target = $region3
    $region8: #{tpu_custom_call.1} parent=1 // loop_exit
      _
    %520 = vsyncpa [#allocation6], 1
    %s521 = scalar_lea.sflag [#allocation6], 1
    %522 = vsyncpa %s521, 1
    %523 = vsyncpa [#allocation9], 1
    %s524 = scalar_lea.sflag [#allocation9], 1
    %525 = vsyncpa %s524, 1
    %526 = vsyncpa [#allocation7], 1
    %s527 = scalar_lea.sflag [#allocation7], 1
    %528 = vsyncpa %s527, 1

</llo_original>
